<compile_context>
chip_gen: v7x
topology: tpu7x:2x2x1
jax: 0.10.0
libtpu: 0.0.40
codegen_flags: <defaults>
</compile_context>

<pallas_src>
import jax
import jax.numpy as jnp
from jax.experimental import pallas as pl
from jax.experimental.pallas import tpu as pltpu


def _noise_level_embedding_kernel(x_ref, fp_ref, a1_ref, a2_ref, o_ref):
    # x_ref : (TB, 1)     f32      noise levels (batch tile)
    # fp_ref: (2, C+1)    f32      row 0 = freqs [2piW, 2piW, 0]
    #                              row 1 = phase [0,    pi/2, pi/2]
    # a1_ref: (C+1, H)    f32/bf16 [W1 ; b1]   (in, out) layout
    # a2_ref: (H+1, C)    f32/bf16 [W2 ; b2]
    # o_ref : (TB, C)
    H = a2_ref.shape[0] - 1
    mm_dtype = a1_ref.dtype

    freqs = fp_ref[0:1, :]                      # (1, C+1)
    phase = fp_ref[1:2, :]                      # (1, C+1)

    # Phase-augmented Fourier features: [sin, cos, 1] in one transcendental.
    h = jnp.sin(x_ref[...] * freqs + phase)     # (TB, C+1) f32 (VPU/EUP)

    # Linear(C -> 4C) with the bias folded into the MXU via the "1" channel.
    z = jnp.dot(h.astype(mm_dtype), a1_ref[...],
                preferred_element_type=jnp.float32)          # (TB, H)

    # SiLU in f32 on the VPU/EUP.
    z = z * jax.nn.sigmoid(z)

    # Linear(4C -> C), bias packed as the last row of a2.
    out = (jnp.dot(z.astype(mm_dtype), a2_ref[0:H, :],
                   preferred_element_type=jnp.float32)
           + a2_ref[H:H + 1, :].astype(jnp.float32))
    o_ref[...] = out.astype(o_ref.dtype)


def prepare_params(W, W1, b1, W2, b2, *, matmul_dtype=jnp.bfloat16):
    """One-time parameter packing -- call at init, NOT per forward pass.

    Returns:
      fp : (2, C+1) f32   row 0 freqs (2*pi folded, last entry 0),
                          row 1 phases (0 / pi/2 / pi/2)
      a1 : (C+1, H)       [W1 ; b1]  in matmul_dtype
      a2 : (H+1, C)       [W2 ; b2]  in matmul_dtype
    """
    half = W.shape[0]
    C = 2 * half
    H = W1.shape[1]
    assert W1.shape == (C, H) and b1.shape == (H,)
    assert W2.shape == (H, C) and b2.shape == (C,)

    two_pi_w = W.astype(jnp.float32) * (2.0 * jnp.pi)
    freqs = jnp.concatenate(
        [two_pi_w, two_pi_w, jnp.zeros((1,), jnp.float32)])          # (C+1,)
    phase = jnp.concatenate(
        [jnp.zeros((half,), jnp.float32),
         jnp.full((half,), jnp.pi / 2, jnp.float32),
         jnp.full((1,), jnp.pi / 2, jnp.float32)])                   # (C+1,)
    fp = jnp.stack([freqs, phase], axis=0)                           # (2, C+1)

    a1 = jnp.concatenate([W1, b1.reshape(1, H)], axis=0).astype(matmul_dtype)
    a2 = jnp.concatenate([W2, b2.reshape(1, C)], axis=0).astype(matmul_dtype)
    return fp, a1, a2


def noise_level_embedding(x, fp, a1, a2, *, block_b=2048,
                          out_dtype=jnp.float32):
    """x: (B,) noise levels (float). fp/a1/a2 from prepare_params().

    Returns (B, C) in out_dtype (default float32, matching the PyTorch module).
    """
    B = x.shape[0]
    Cp1 = fp.shape[1]
    C = Cp1 - 1
    H = a1.shape[1]
    assert fp.shape == (2, Cp1)
    assert a1.shape == (C + 1, H) and a2.shape == (H + 1, C)

    # Per-call activation prep only; all parameter prep lives in prepare_params.
    x2 = x.reshape(B, 1).astype(jnp.float32)

    if B <= block_b:
        # Small batch: single block (grid collapses to (1,)), VMEM is tiny.
        block_b = B
        Bp = B
    else:
        # Large batch: keep the fixed block size and zero-pad the batch to a
        # multiple of it, so we never create one giant VMEM-busting block and
        # we keep pipelining + multi-TC sharding.
        Bp = ((B + block_b - 1) // block_b) * block_b
        if Bp != B:
            x2 = jnp.pad(x2, ((0, Bp - B), (0, 0)))

    grid = (Bp // block_b,)

    out = pl.pallas_call(
        _noise_level_embedding_kernel,
        out_shape=jax.ShapeDtypeStruct((Bp, C), out_dtype),
        grid=grid,
        in_specs=[
            pl.BlockSpec((block_b, 1), lambda i: (i, 0)),   # x   (batch-tiled)
            pl.BlockSpec((2, Cp1), lambda i: (0, 0)),       # freq/phase (resident)
            pl.BlockSpec((C + 1, H), lambda i: (0, 0)),     # [W1; b1]   (resident)
            pl.BlockSpec((H + 1, C), lambda i: (0, 0)),     # [W2; b2]   (resident)
        ],
        out_specs=pl.BlockSpec((block_b, C), lambda i: (i, 0)),
        compiler_params=pltpu.CompilerParams(
            dimension_semantics=("parallel",)),
    )(x2, fp, a1, a2)

    if Bp != B:
        out = out[:B]
    return out


def _reference(x, W, W1, b1, W2, b2):
    h = x[:, None] * W[None, :] * (2.0 * jnp.pi)
    h = jnp.concatenate([jnp.sin(h), jnp.cos(h)], axis=-1)
    z = h @ W1 + b1
    z = z * jax.nn.sigmoid(z)
    return z @ W2 + b2


if __name__ == "__main__":
    B = 8           # batch of noise levels
    channels = 32   # embedding channels
    scale = 16.0
    H = 4 * channels

    key = jax.random.PRNGKey(0)
    k_x, k_w, k_w1, k_b1, k_w2, k_b2, k_xl = jax.random.split(key, 7)

    # Deterministic synthetic parameters (shapes per module __init__).
    x = jax.random.uniform(k_x, (B,), jnp.float32)                      # noise levels
    W = jax.random.normal(k_w, (channels // 2,), jnp.float32) * scale   # fixed Fourier freqs
    W1 = jax.random.normal(k_w1, (channels, H), jnp.float32) * 0.05     # Linear(C, 4C) weight (in,out)
    b1 = jax.random.normal(k_b1, (H,), jnp.float32) * 0.05
    W2 = jax.random.normal(k_w2, (H, channels), jnp.float32) * 0.05     # Linear(4C, C) weight (in,out)
    b2 = jax.random.normal(k_b2, (channels,), jnp.float32) * 0.05

    ref = _reference(x, W, W1, b1, W2, b2)

    # 1) f32-weight path: tight check of the kernel math (phase-augmented sin,
    #    MXU-folded layer-1 bias, packed layer-2 bias, folded 2*pi).
    fp32, a1_32, a2_32 = prepare_params(W, W1, b1, W2, b2,
                                        matmul_dtype=jnp.float32)
    out_f32 = jax.block_until_ready(noise_level_embedding(x, fp32, a1_32, a2_32))
    assert out_f32.shape == (B, channels)
    assert jnp.allclose(out_f32, ref, atol=5e-3, rtol=5e-3), "f32 path mismatch"

    # 2) Default bf16-weight path (MXU-native on v6e/v7x); looser tolerance
    #    since matmul operands (incl. packed biases) are bf16, accumulation f32.
    fp, a1, a2 = prepare_params(W, W1, b1, W2, b2)
    out = jax.block_until_ready(noise_level_embedding(x, fp, a1, a2))
    assert out.shape == (B, channels)
    assert jnp.allclose(out, ref, atol=5e-2, rtol=5e-2), "bf16 path mismatch"

    # 3) Multi-step grid + non-divisible batch: exercises the pad-to-multiple
    #    tiling path (no giant fallback block) at a still-small shape.
    Bl = 300
    xl = jax.random.uniform(k_xl, (Bl,), jnp.float32)
    ref_l = _reference(xl, W, W1, b1, W2, b2)
    out_l = jax.block_until_ready(
        noise_level_embedding(xl, fp32, a1_32, a2_32, block_b=128))
    assert out_l.shape == (Bl, channels)
    assert jnp.allclose(out_l, ref_l, atol=5e-3, rtol=5e-3), "tiled path mismatch"

    print("KERNEL_OK")
</pallas_src>

<mosaic_0001>
module attributes {stable_mosaic.version = 11 : i64} {
  func.func @_noise_level_embedding_kernel(%arg0: i32, %arg1: memref<8x1xf32, #tpu.memory_space<vmem>>, %arg2: memref<2x33xf32, #tpu.memory_space<vmem>>, %arg3: memref<33x128xf32, #tpu.memory_space<vmem>>, %arg4: memref<129x32xf32, #tpu.memory_space<vmem>>, %arg5: memref<8x32xf32, #tpu.memory_space<vmem>>) attributes {dimension_semantics = [#tpu.dimension_semantics<parallel>], iteration_bounds = array<i64: 1>, scalar_prefetch = 0 : i64, scratch_operands = 0 : i64, tpu.core_type = #tpu.core_type<tc>, window_params = [{transform_indices = @transform_0, window_bounds = array<i64: 8, 1>}, {pipeline_mode = #tpu.pipeline_mode<synchronous>, transform_indices = @transform_1, window_bounds = array<i64: 2, 33>}, {pipeline_mode = #tpu.pipeline_mode<synchronous>, transform_indices = @transform_2, window_bounds = array<i64: 33, 128>}, {pipeline_mode = #tpu.pipeline_mode<synchronous>, transform_indices = @transform_3, window_bounds = array<i64: 129, 32>}, {transform_indices = @transform_4, window_bounds = array<i64: 8, 32>}]} {
    %c0 = arith.constant 0 : index
    %c0_0 = arith.constant 0 : index
    %0 = vector.load %arg2[%c0, %c0_0] : memref<2x33xf32, #tpu.memory_space<vmem>>, vector<1x33xf32>
    %c1 = arith.constant 1 : index
    %c0_1 = arith.constant 0 : index
    %1 = vector.load %arg2[%c1, %c0_1] : memref<2x33xf32, #tpu.memory_space<vmem>>, vector<1x33xf32>
    %c0_2 = arith.constant 0 : index
    %c0_3 = arith.constant 0 : index
    %2 = vector.load %arg1[%c0_2, %c0_3] : memref<8x1xf32, #tpu.memory_space<vmem>>, vector<8x1xf32>
    %3 = vector.broadcast %2 : vector<8x1xf32> to vector<8x33xf32>
    %4 = vector.broadcast %0 : vector<1x33xf32> to vector<8x33xf32>
    %5 = arith.mulf %3, %4 : vector<8x33xf32>
    %6 = vector.broadcast %1 : vector<1x33xf32> to vector<8x33xf32>
    %7 = arith.addf %5, %6 : vector<8x33xf32>
    %8 = math.sin %7 : vector<8x33xf32>
    %c0_4 = arith.constant 0 : index
    %c0_5 = arith.constant 0 : index
    %9 = vector.load %arg3[%c0_4, %c0_5] : memref<33x128xf32, #tpu.memory_space<vmem>>, vector<33x128xf32>
    %cst = arith.constant dense<0.000000e+00> : vector<8x128xf32>
    %10 = tpu.matmul %8, %9, %cst {dimension_numbers = #tpu.dot_dimension_numbers<[1], [0], [0], [1], [0, 0, 1, 1], [], []>} : vector<8x33xf32>, vector<33x128xf32>, vector<8x128xf32> -> vector<8x128xf32>
    %11 = arith.negf %10 : vector<8x128xf32>
    %12 = math.exp %11 : vector<8x128xf32>
    %cst_6 = arith.constant 1.000000e+00 : f32
    %13 = vector.broadcast %cst_6 : f32 to vector<8x128xf32>
    %14 = arith.addf %13, %12 : vector<8x128xf32>
    %15 = arith.divf %13, %14 : vector<8x128xf32>
    %16 = arith.mulf %10, %15 : vector<8x128xf32>
    %c0_7 = arith.constant 0 : index
    %c0_8 = arith.constant 0 : index
    %17 = vector.load %arg4[%c0_7, %c0_8] : memref<129x32xf32, #tpu.memory_space<vmem>>, vector<128x32xf32>
    %cst_9 = arith.constant dense<0.000000e+00> : vector<8x32xf32>
    %18 = tpu.matmul %16, %17, %cst_9 {dimension_numbers = #tpu.dot_dimension_numbers<[1], [0], [0], [1], [0, 0, 1, 1], [], []>} : vector<8x128xf32>, vector<128x32xf32>, vector<8x32xf32> -> vector<8x32xf32>
    %c128 = arith.constant 128 : index
    %c0_10 = arith.constant 0 : index
    %19 = vector.load %arg4[%c128, %c0_10] : memref<129x32xf32, #tpu.memory_space<vmem>>, vector<1x32xf32>
    %20 = vector.broadcast %19 : vector<1x32xf32> to vector<8x32xf32>
    %21 = arith.addf %18, %20 : vector<8x32xf32>
    %c0_11 = arith.constant 0 : index
    %c0_12 = arith.constant 0 : index
    %22 = vector.load %arg5[%c0_11, %c0_12] : memref<8x32xf32, #tpu.memory_space<vmem>>, vector<8x32xf32>
    tpu.vector_store %arg5[%c0_11, %c0_12], %21 {strides = array<i32>} : memref<8x32xf32, #tpu.memory_space<vmem>>, vector<8x32xf32>,
    return
  }
  func.func @transform_0(%arg0: i32) -> (i32, i32) {
    %c0_i32 = arith.constant 0 : i32
    %c0_i32_0 = arith.constant 0 : i32
    return %arg0, %c0_i32 : i32, i32
  }
  func.func @transform_1(%arg0: i32) -> (i32, i32) {
    %c0_i32 = arith.constant 0 : i32
    %c0_i32_0 = arith.constant 0 : i32
    %c0_i32_1 = arith.constant 0 : i32
    return %c0_i32, %c0_i32_0 : i32, i32
  }
  func.func @transform_2(%arg0: i32) -> (i32, i32) {
    %c0_i32 = arith.constant 0 : i32
    %c0_i32_0 = arith.constant 0 : i32
    %c0_i32_1 = arith.constant 0 : i32
    return %c0_i32, %c0_i32_0 : i32, i32
  }
  func.func @transform_3(%arg0: i32) -> (i32, i32) {
    %c0_i32 = arith.constant 0 : i32
    %c0_i32_0 = arith.constant 0 : i32
    %c0_i32_1 = arith.constant 0 : i32
    return %c0_i32, %c0_i32_0 : i32, i32
  }
  func.func @transform_4(%arg0: i32) -> (i32, i32) {
    %c0_i32 = arith.constant 0 : i32
    %c0_i32_0 = arith.constant 0 : i32
    return %arg0, %c0_i32 : i32, i32
  }
}

</mosaic_0001>

<llo_original>
// kernel: tpu_custom_call.1
$region0: #{tpu_custom_call.1}
  #allocation0 [shape = 'u32[]', space=smem, size = 0x4, offset = 0x4, fixed_abs, tag = 'smem constant byte address 0x4 - core index']
  #allocation1 [shape = 'u32[144,128]{1,0:T(1,128)}', space=vmem, size = 0x12000, scoped, tag = 'internal scratch']
  %s0 = inlined_call_operand.vmem [shape: f32[8,1], index: 0, kind: input, shape index: {}]
  %s1 = inlined_call_operand.vmem [shape: f32[2,33], index: 1, kind: input, shape index: {}]
  %s2 = inlined_call_operand.vmem [shape: f32[33,128], index: 2, kind: input, shape index: {}]
  %s3 = inlined_call_operand.vmem [shape: f32[129,32], index: 3, kind: input, shape index: {}]
  %s4 = inlined_call_operand.hbm [shape: f32[8,32], index: 4, kind: output, shape index: {}]
  %s5 = sld [smem:[#allocation0]]
  $region26: #{tpu_custom_call.1} parent=0
    _
  %s7 = ssub.s32 1, %s5
  %s8 = scalar_select 0, %s7, %s5
  $region1: #{tpu_custom_call.1} parent=0
    #allocation2 [shape = 'u8[4096]{0}', space=vmem, size = 0x1000, scoped, tag = 'output window, operand 0, single buffered']
    #allocation3 [shape = 's32[1]{0}', space=sflag, size = 0x4, scoped, tag = 'scoped memory for tpu_custom_call.1']
    %9 = vsyncpa [#allocation3], 0
    // Predicated region
    $region2: #{tpu_custom_call.1} parent=1 // pred_check
      _
    $region3: #{tpu_custom_call.1} parent=1 // pred_check_branch
      %11 = sbr.rel (0) target = $region5
    $region4: #{tpu_custom_call.1} parent=1 // pred_region
      _
    $region5: #{tpu_custom_call.1} parent=1 // pred_fallthru
      _
    // Predicated region
    $region6: #{tpu_custom_call.1} parent=1 // pred_check
      _
    $region7: #{tpu_custom_call.1} parent=1 // pred_check_branch
      %13 = sbr.rel (0) target = $region9
    $region8: #{tpu_custom_call.1} parent=1 // pred_region
      _
    $region9: #{tpu_custom_call.1} parent=1 // pred_fallthru
      _
    // Predicated region
    $region10: #{tpu_custom_call.1} parent=1 // pred_check
      _
    $region11: #{tpu_custom_call.1} parent=1 // pred_check_branch
      %15 = sbr.rel (0) target = $region13
    $region12: #{tpu_custom_call.1} parent=1 // pred_region
      _
    $region13: #{tpu_custom_call.1} parent=1 // pred_fallthru
      _
    // Predicated region
    $region14: #{tpu_custom_call.1} parent=1 // pred_check
      _
    $region15: #{tpu_custom_call.1} parent=1 // pred_check_branch
      %17 = sbr.rel (0) target = $region17
    $region16: #{tpu_custom_call.1} parent=1 // pred_region
      _
    $region17: #{tpu_custom_call.1} parent=1 // pred_fallthru
      _
    %v18 = vld [vmem:[%s1] sm:$0x1]
    %v19 = vld [vmem:[%s1 + $0x1] sm:$0x1]
    %v20 = vld [vmem:[%s0] sm:$0xff]
    %22 = vset.pattern.permute.xlu0 0
    %23 = vperm.xlu0 %22, %v20
    %v24 = vpop.permute.xlu0 %23
    %v26 = vlaneseq
    %v27 = vshrl.u32 %v26, 7
    %v28 = vsub.s32 0, %v27
    %v29 = vrot.slane %v18, %v28
    %v30 = vmul.f32 %v24, %v29
    %v31 = vlaneseq
    %v32 = vshrl.u32 %v31, 7
    %v33 = vsub.s32 0, %v32
    %v34 = vrot.slane %v19, %v33
    %v35 = vadd.f32 %v30, %v34
    %v36 = vand.u32 2147483647, %v35
    %vm37 = vcmp.le.f32.partialorder %v36, 0.7853982
    %vm38 = vcmp.lt.s32.totalorder %v35, 0
    %v39 = vand.u32 %v35, 2139095040
    %v40 = vshrl.u32 %v39, 23
    %v41 = vsub.s32 %v40, 127
    %v42 = vand.u32 2147483647, %v35
    %v43 = vand.u32 %v42, 8388607
    %v44 = vor.u32 %v43, 8388608
    %v45 = vsub.s32 0, %v44
    %v46 = vadd.s32 %v41, 1
    %vm47 = vcmp.gt.s32.totalorder %v46, 0
    %v48 = vsel %vm47, %v46, 0
    %v49 = vshrl.u32 %v48, 5
    %v50 = vand.u32 %v48, 31
    %v51 = vsub.s32 32, %v50
    %v52 = vshrl.u32 683565275, %v51
    %v53 = vshll.u32 683565275, %v50
    %v54 = vshrl.u32 2475754826, %v51
    %v55 = vor.u32 %v53, %v54
    %v56 = vshll.u32 2475754826, %v50
    %v57 = vshrl.u32 2131351028, %v51
    %v58 = vor.u32 %v56, %v57
    %v59 = vshll.u32 2131351028, %v50
    %v60 = vshrl.u32 2102212464, %v51
    %v61 = vor.u32 %v59, %v60
    %v62 = vshll.u32 2102212464, %v50
    %v63 = vshrl.u32 920167782, %v51
    %v64 = vor.u32 %v62, %v63
    %v65 = vshll.u32 920167782, %v50
    %v66 = vshrl.u32 1326507024, %v51
    %v67 = vor.u32 %v65, %v66
    %vm68 = vcmp.lt.s32.totalorder %v49, 1
    %vm69 = vcmp.lt.s32.totalorder %v49, 2
    %vm70 = vcmp.lt.s32.totalorder %v49, 3
    %vm71 = vcmp.lt.s32.totalorder %v49, 4
    %v72 = vsel %vm68, %v52, %v55
    %v73 = vsel %vm71, %v61, 2102212464
    %v74 = vsel %vm70, %v58, %v73
    %v75 = vsel %vm69, %v72, %v74
    %v76 = vsel %vm68, %v55, %v58
    %v77 = vsel %vm71, %v64, 920167782
    %v78 = vsel %vm70, %v61, %v77
    %v79 = vsel %vm69, %v76, %v78
    %v80 = vsel %vm68, %v58, %v61
    %v81 = vsel %vm71, %v67, 1326507024
    %v82 = vsel %vm70, %v64, %v81
    %v83 = vsel %vm69, %v80, %v82
    %v84 = vshll.u32 %v44, 8
    %v85 = vmul.u32.u64.compose %v84, %v83
    %v86 = vextract.low.u32 %v85
    %v87 = vextract.high.u32 %v85
    %v88 = vmul.u32.u64.compose %v84, %v79
    %v89 = vextract.low.u32 %v88
    %v90 = vextract.high.u32 %v88
    %v91 = vmul.u32 %v84, %v75
    %v92 = vadd.s32 %v87, %v89
    %vm93 = vc.u32 %v87, %v89
    %v94 = vadd.s32 %v90, 1
    %v95 = vsel %vm93, %v94, %v90
    %v96 = vadd.s32 %v91, %v95
    %v97 = vadd.s32 %v96, 536870912
    %v98 = vshrl.u32 %v97, 30
    %v99 = vshll.u32 %v98, 30
    %v100 = vsub.s32 %v96, %v99
    %vm101 = vcmp.lt.s32.totalorder %v100, 0
    %v102 = vsub.s32 0, %v100
    %v103 = vsel %vm101, %v102, %v100
    %v104 = vclz %v103
    %v105 = vsub.s32 %v104, 2
    %vm106 = vcmp.gt.s32.totalorder 0, %v105
    %v107 = vsel %vm106, 0, %v105
    %v108 = vsub.s32 32, %v107
    %v109 = vshll.u32 %v100, %v107
    %v110 = vshrl.u32 %v92, %v108
    %v111 = vor.u32 %v109, %v110
    %v112 = vsub.s32 4294967266, %v107
    %v113 = vadd.s32 %v112, 127
    %v114 = vshll.u32 %v113, 23
    %v115 = vor.u32 4788187, %v114
    %v116 = vand.u32 2147483647, %v115
    %v118 = vcvt.s32.f32 %v111
    %v119 = vmul.f32 %v118, %v116
    %v120 = vxor.u32 %v119, 2147483648
    %v121 = vsel %vm38, %v120, %v119
    %v122 = vsub.s32 4, %v98
    %v123 = vsel %vm38, %v122, %v98
    %v124 = vsel %vm37, %v35, %v121
    %v125 = vsel %vm37, 0, %v123
    %v126 = vcosq.f32.pop %v124
    %v127 = vsinq.f32.pop %v124
    %vm128 = vweird.f32 %v35
    %v129 = vadd.s32 %v125, 3
    %v130 = vand.u32 %v129, 3
    %vm131 = vcmp.lt.s32.totalorder %v130, 2
    %vm132 = vcmp.eq.s32.totalorder %v130, 0
    %v133 = vxor.u32 %v127, 2147483648
    %v134 = vsel %vm132, %v126, %v133
    %vm135 = vcmp.eq.s32.totalorder %v130, 2
    %v136 = vxor.u32 %v126, 2147483648
    %v137 = vsel %vm135, %v136, %v127
    %v138 = vsel %vm131, %v134, %v137
    %v139 = vsel %vm128, nan, %v138
    %v140 = vld [vmem:[%s2] sm:$0xff]
    %v141 = vld [vmem:[%s2 + $0x8] sm:$0xff]
    %v142 = vld [vmem:[%s2 + $0x10] sm:$0xff]
    %v143 = vld [vmem:[%s2 + $0x18] sm:$0xff]
    %v144 = vld [vmem:[%s2 + $0x20] sm:$0x1]
    %vm145 = vcmask 269312
    %v147 = vsel %vm145, %v139, 0
    %vm149 = vcmask 1040384
    %v151 = vsel %vm149, %v144, 0
    %153 = vmatprep.subr.mxu0 0.0
    %154 = vmatpush1.msra.mxu0 %v140
    %155 = vmatprep.subr.mxu0 0.0
    %156 = vmatpush1.msra.mxu0 %v141
    %157 = vmatprep.subr.mxu0 0.0
    %158 = vmatpush1.msra.mxu0 %v142
    %159 = vmatprep.subr.mxu0 0.0
    %160 = vmatpush1.msra.mxu0 %v143
    %161 = vmatprep.subr.mxu0 0.0
    %162 = vmatpush1.msra.mxu0 %v151
    %163 = vmatprep.subr.mxu0 0.0
    %164 = vmatpush1.msra.mxu0 0.0
    %165 = vmatprep.subr.mxu0 0.0
    %166 = vmatpush1.msra.mxu0 0.0
    %167 = vmatprep.subr.mxu0 0.0
    %168 = vmatpush1.msra.mxu0 0.0
    %169 = vmatprep.subr.mxu0 0.0
    %170 = vmatpush1.msra.mxu0 0.0
    %171 = vmatprep.subr.mxu0 0.0
    %172 = vmatpush1.msra.mxu0 0.0
    %173 = vmatprep.subr.mxu0 0.0
    %174 = vmatpush1.msra.mxu0 0.0
    %175 = vmatprep.subr.mxu0 0.0
    %176 = vmatpush1.msra.mxu0 0.0
    %177 = vmatprep.subr.mxu0 0.0
    %178 = vmatpush1.msra.mxu0 0.0
    %179 = vmatprep.subr.mxu0 0.0
    %180 = vmatpush1.msra.mxu0 0.0
    %181 = vmatprep.subr.mxu0 0.0
    %182 = vmatpush1.msra.mxu0 0.0
    %183 = vmatprep.subr.mxu0 0.0
    %184 = vmatpush1.msra.mxu0 0.0
    %185 = vmatprep.subr.mxu0 0.0
    %186 = vmatpush1.msra.mxu0 0.0
    %187 = vmatprep.subr.mxu0 0.0
    %188 = vmatpush1.msra.mxu0 0.0
    %189 = vmatprep.subr.mxu0 0.0
    %190 = vmatpush1.msra.mxu0 0.0
    %191 = vmatprep.subr.mxu0 0.0
    %192 = vmatpush1.msra.mxu0 0.0
    %193 = vmatprep.subr.mxu0 0.0
    %194 = vmatpush1.msra.mxu0 0.0
    %195 = vmatprep.subr.mxu0 0.0
    %196 = vmatpush1.msra.mxu0 0.0
    %197 = vmatprep.subr.mxu0 0.0
    %198 = vmatpush1.msra.mxu0 0.0
    %199 = vmatprep.subr.mxu0 0.0
    %200 = vmatpush1.msra.mxu0 0.0
    %201 = vmatprep.subr.mxu0 0.0
    %202 = vmatpush1.msra.mxu0 0.0
    %203 = vmatprep.subr.mxu0 0.0
    %204 = vmatpush1.msra.mxu0 0.0
    %205 = vmatprep.subr.mxu0 0.0
    %206 = vmatpush1.msra.mxu0 0.0
    %207 = vmatprep.subr.mxu0 0.0
    %208 = vmatpush1.msra.mxu0 0.0
    %209 = vmatprep.subr.mxu0 0.0
    %210 = vmatpush1.msra.mxu0 0.0
    %211 = vmatprep.subr.mxu0 0.0
    %212 = vmatpush1.msra.mxu0 0.0
    %213 = vmatprep.subr.mxu0 0.0
    %214 = vmatpush1.msra.mxu0 0.0
    %215 = vmatprep.subr.mxu0 0.0
    %216 = vmatpush1.msra.mxu0 0.0
    %217 = vmatprep.mubr.f32.mxu0 0.0
    %218 = vmatmul.mubr.f32.gmra.mrb[0].mxu0 %v147
    %v219 = vpop.f32.mrb[0].mxu0
    %v220 = vadd.f32 0.0, %v219
    %v221 = vpop.f32.mrb[0].mxu0
    %222 = vdwg.mxu0
    %v223 = vxor.u32 %v220, 2147483648
    %v224 = vmul.f32 %v223, 1.442695
    %v225 = vpow.pop %v224
    %v226 = vadd.f32 %v225, 1.0
    %v227 = vrcp.pop %v226
    %v228 = vmul.f32 1.0, %v227
    %v229 = vmul.f32 %v220, %v228
    %v230 = vld [vmem:[%s3] sm:$0xff]
    %v231 = vld [vmem:[%s3 + $0x8] sm:$0xff]
    %v232 = vld [vmem:[%s3 + $0x10] sm:$0xff]
    %v233 = vld [vmem:[%s3 + $0x18] sm:$0xff]
    %v234 = vld [vmem:[%s3 + $0x20] sm:$0xff]
    %v235 = vld [vmem:[%s3 + $0x28] sm:$0xff]
    %v236 = vld [vmem:[%s3 + $0x30] sm:$0xff]
    %v237 = vld [vmem:[%s3 + $0x38] sm:$0xff]
    %v238 = vld [vmem:[%s3 + $0x40] sm:$0xff]
    %v239 = vld [vmem:[%s3 + $0x48] sm:$0xff]
    %v240 = vld [vmem:[%s3 + $0x50] sm:$0xff]
    %v241 = vld [vmem:[%s3 + $0x58] sm:$0xff]
    %v242 = vld [vmem:[%s3 + $0x60] sm:$0xff]
    %v243 = vld [vmem:[%s3 + $0x68] sm:$0xff]
    %v244 = vld [vmem:[%s3 + $0x70] sm:$0xff]
    %v245 = vld [vmem:[%s3 + $0x78] sm:$0xff]
    %v246 = vld [vmem:[%s3 + $0x80] sm:$0x1]
    %v247 = vlaneseq
    %v248 = vshrl.u32 %v247, 7
    %v249 = vsub.s32 0, %v248
    %v250 = vrot.slane %v246, %v249
    %251 = vmatprep.subr.mxu0 0.0
    %252 = vmatpush1.msra.mxu0 %v230
    %253 = vmatprep.subr.mxu0 0.0
    %254 = vmatpush1.msra.mxu0 %v231
    %255 = vmatprep.subr.mxu0 0.0
    %256 = vmatpush1.msra.mxu0 %v232
    %257 = vmatprep.subr.mxu0 0.0
    %258 = vmatpush1.msra.mxu0 %v233
    %259 = vmatprep.subr.mxu0 0.0
    %260 = vmatpush1.msra.mxu0 %v234
    %261 = vmatprep.subr.mxu0 0.0
    %262 = vmatpush1.msra.mxu0 %v235
    %263 = vmatprep.subr.mxu0 0.0
    %264 = vmatpush1.msra.mxu0 %v236
    %265 = vmatprep.subr.mxu0 0.0
    %266 = vmatpush1.msra.mxu0 %v237
    %267 = vmatprep.subr.mxu0 0.0
    %268 = vmatpush1.msra.mxu0 %v238
    %269 = vmatprep.subr.mxu0 0.0
    %270 = vmatpush1.msra.mxu0 %v239
    %271 = vmatprep.subr.mxu0 0.0
    %272 = vmatpush1.msra.mxu0 %v240
    %273 = vmatprep.subr.mxu0 0.0
    %274 = vmatpush1.msra.mxu0 %v241
    %275 = vmatprep.subr.mxu0 0.0
    %276 = vmatpush1.msra.mxu0 %v242
    %277 = vmatprep.subr.mxu0 0.0
    %278 = vmatpush1.msra.mxu0 %v243
    %279 = vmatprep.subr.mxu0 0.0
    %280 = vmatpush1.msra.mxu0 %v244
    %281 = vmatprep.subr.mxu0 0.0
    %282 = vmatpush1.msra.mxu0 %v245
    %283 = vmatprep.subr.mxu0 0.0
    %284 = vmatpush1.msra.mxu0 0.0
    %285 = vmatprep.subr.mxu0 0.0
    %286 = vmatpush1.msra.mxu0 0.0
    %287 = vmatprep.subr.mxu0 0.0
    %288 = vmatpush1.msra.mxu0 0.0
    %289 = vmatprep.subr.mxu0 0.0
    %290 = vmatpush1.msra.mxu0 0.0
    %291 = vmatprep.subr.mxu0 0.0
    %292 = vmatpush1.msra.mxu0 0.0
    %293 = vmatprep.subr.mxu0 0.0
    %294 = vmatpush1.msra.mxu0 0.0
    %295 = vmatprep.subr.mxu0 0.0
    %296 = vmatpush1.msra.mxu0 0.0
    %297 = vmatprep.subr.mxu0 0.0
    %298 = vmatpush1.msra.mxu0 0.0
    %299 = vmatprep.subr.mxu0 0.0
    %300 = vmatpush1.msra.mxu0 0.0
    %301 = vmatprep.subr.mxu0 0.0
    %302 = vmatpush1.msra.mxu0 0.0
    %303 = vmatprep.subr.mxu0 0.0
    %304 = vmatpush1.msra.mxu0 0.0
    %305 = vmatprep.subr.mxu0 0.0
    %306 = vmatpush1.msra.mxu0 0.0
    %307 = vmatprep.subr.mxu0 0.0
    %308 = vmatpush1.msra.mxu0 0.0
    %309 = vmatprep.subr.mxu0 0.0
    %310 = vmatpush1.msra.mxu0 0.0
    %311 = vmatprep.subr.mxu0 0.0
    %312 = vmatpush1.msra.mxu0 0.0
    %313 = vmatprep.subr.mxu0 0.0
    %314 = vmatpush1.msra.mxu0 0.0
    %315 = vmatprep.mubr.f32.mxu0 0.0
    %316 = vmatmul.mubr.f32.gmra.mrb[0].mxu0 %v229
    %v317 = vpop.f32.mrb[0].mxu0
    %v318 = vadd.f32 %v250, %v317
    %v319 = vpop.f32.mrb[0].mxu0
    %320 = vdwg.mxu0
    %vm321 = vcmask 261120
    %322 = vst.msk [vmem:[#allocation2] sm:$0xff] %vm321, %v318
    // Predicated region
    $region18: #{tpu_custom_call.1} parent=1 // pred_check
      _
    $region19: #{tpu_custom_call.1} parent=1 // pred_check_branch
      %324 = sbr.rel (0) target = $region21
    $region20: #{tpu_custom_call.1} parent=1 // pred_region
      %s326 = ssub.s32 128, 128
      %327 = vsyncadd [#allocation3], %s326
      %s329 = sshll.u32 [#allocation2], 4
      %s330 = int_to_ptr.vmem [resolvable:$true] %s329
      %332 = dma.vmem_to_hbm [thread:$0]  %s330, 128, %s4, [#allocation3]
    $region21: #{tpu_custom_call.1} parent=1 // pred_fallthru
      _
    // Predicated region
    $region22: #{tpu_custom_call.1} parent=1 // pred_check
      _
    $region23: #{tpu_custom_call.1} parent=1 // pred_check_branch
      %334 = sbr.rel (0) target = $region25
    $region24: #{tpu_custom_call.1} parent=1 // pred_region
      %335 = dma.done [#allocation3], 128
    $region25: #{tpu_custom_call.1} parent=1 // pred_fallthru
      _
    %336 = vsyncpa [#allocation3], 1

</llo_original>
